<compile_context>
chip_gen: v5e
topology: v5e:2x2
jax: 0.10.0
libtpu: 0.0.40
codegen_flags: <defaults>
</compile_context>

<pallas_src>
import functools

import jax
import jax.numpy as jnp
import numpy as np
from jax.experimental import pallas as pl
from jax.experimental.pallas import tpu as pltpu


def _vmem_limit_bytes():
    """Per-generation VMEM budget (3/4 of physical), with a safe fallback."""
    try:
        cap = pltpu.get_tpu_info().vmem_capacity_bytes
    except Exception:
        cap = 64 * 1024 * 1024
    return int(cap) * 3 // 4


def _rpn_head_kernel(x_ref, w9_ref, bconv_ref, wh_ref, bh_ref, out_ref,
                     pad_ref, *, height, width):
    # x_ref:     (1, C, H*W)          feature map, flattened spatial in lanes
    # w9_ref:    (9, C, C)   bf16     3x3 conv taps, one (C_out, C_in) slab/tap
    # bconv_ref: (C, 1)      f32      conv bias
    # wh_ref:    (P, C)      bf16     fused [cls ; bbox] 1x1 weights, P = pad(5A, 8)
    # bh_ref:    (P, 1)      f32      fused head bias (zero-padded rows)
    # out_ref:   (1, P, H*W)          fused head output (lane-dense in H*W)
    # pad_ref:   (C, H*W + 2W + 2)    VMEM scratch: [0s(W+1) | x_flat | 0s(W+1)]
    HW = height * width
    W = width
    C = x_ref.shape[1]

    # Only the zero guards need writing; the interior is fully overwritten.
    # (Written every step so the kernel stays correct when the batch axis is
    #  megacore-sharded and each core owns its own scratch.)
    pad_ref[:, :W + 1] = jnp.zeros((C, W + 1), pad_ref.dtype)
    pad_ref[:, W + 1 + HW:] = jnp.zeros((C, W + 1), pad_ref.dtype)
    # TODO(synk): stage the feature map in bf16 (halves scratch + tap loads)
    # once verified on v5e's f32-only VPU path.
    pad_ref[:, W + 1:W + 1 + HW] = x_ref[0]

    # Hoisted left/right edge masks (column index of every flattened position).
    px = jax.lax.broadcasted_iota(jnp.int32, (1, HW), 1) % W
    keep_l = px >= 1          # valid lanes when reading the dx = -1 neighbour
    keep_r = px < (W - 1)     # valid lanes when reading the dx = +1 neighbour

    dn = (((1,), (0,)), ((), ()))  # plain 2D matmul, contract over axis 1/0

    # conv3x3 = sum over 9 taps of (C, C) @ (C, HW), bf16 operands, f32 acc.
    # No (9C, HW) im2col buffer; each shifted patch is consumed immediately.
    acc = None
    for k in range(9):
        dy, dx = k // 3 - 1, k % 3 - 1
        start = (dy + 1) * W + (dx + 1)
        patch = pad_ref[:, start:start + HW]
        if dx == 1:        # column W-1 would read the next row -> zero it
            patch = jnp.where(keep_r, patch, 0.0)
        elif dx == -1:     # column 0 would read the previous row -> zero it
            patch = jnp.where(keep_l, patch, 0.0)
        contrib = jax.lax.dot_general(
            w9_ref[k], patch.astype(jnp.bfloat16), dn,
            preferred_element_type=jnp.float32)                     # (C, HW)
        acc = contrib if acc is None else acc + contrib

    t = jnp.maximum(acc + bconv_ref[...], 0.0)                      # ReLU, f32

    # Fused cls_logits + bbox_pred 1x1 convs, bf16 operands, f32 accumulate.
    head = jax.lax.dot_general(wh_ref[...], t.astype(jnp.bfloat16), dn,
                               preferred_element_type=jnp.float32)  # (P, HW)
    out_ref[0] = (head + bh_ref[...]).astype(out_ref.dtype)


def _rpn_head_single(x_nchw, params):
    """RPN head on one NCHW feature map; returns NCHW (cls_logits, bbox_pred)."""
    w_conv, b_conv, w_cls, b_cls, w_box, b_box = params   # PyTorch-shaped
    N, C, H, W = x_nchw.shape
    A = w_cls.shape[0]
    HW = H * W
    n_head = 5 * A
    n_head_pad = int(pl.cdiv(n_head, 8)) * 8   # sublane-aligned fused head rows

    # NCHW -> (N, C, H*W): free row-major reshape (no transpose, no HBM pad).
    x_flat = x_nchw.reshape(N, C, HW)

    # OIHW -> (9, C_out, C_in): one weight slab per tap, bf16 MXU operand.
    w9 = jnp.transpose(w_conv, (2, 3, 0, 1)).reshape(9, C, C).astype(jnp.bfloat16)
    bconv = b_conv.reshape(C, 1)

    # Fuse the two 1x1 heads: rows [0:A] = cls, rows [A:5A] = bbox, then pad
    # the row count to a multiple of 8 (clean sublane tiles / stores).
    wh = jnp.concatenate([w_cls[:, :, 0, 0], w_box[:, :, 0, 0]], axis=0)  # (5A, C)
    wh = jnp.pad(wh, ((0, n_head_pad - n_head), (0, 0))).astype(jnp.bfloat16)
    bh = jnp.pad(jnp.concatenate([b_cls, b_box]),
                 (0, n_head_pad - n_head)).reshape(n_head_pad, 1)

    # TODO(synk): at production FPN shapes (C=256, ~200x336) add a grid axis
    # over H row-strips with a 2-row halo (manual DMA of the halo rows into the
    # staging scratch) so blocks fit v7x's 64 MiB VMEM and strips shard across
    # its two TensorCores when N == 1.
    kernel = functools.partial(_rpn_head_kernel, height=H, width=W)
    out = pl.pallas_call(
        kernel,
        out_shape=jax.ShapeDtypeStruct((N, n_head_pad, HW), x_nchw.dtype),
        grid=(N,),
        in_specs=[
            pl.BlockSpec((1, C, HW), lambda n: (n, 0, 0)),
            pl.BlockSpec((9, C, C), lambda n: (0, 0, 0)),
            pl.BlockSpec((C, 1), lambda n: (0, 0)),
            pl.BlockSpec((n_head_pad, C), lambda n: (0, 0)),
            pl.BlockSpec((n_head_pad, 1), lambda n: (0, 0)),
        ],
        out_specs=pl.BlockSpec((1, n_head_pad, HW), lambda n: (n, 0, 0)),
        scratch_shapes=[pltpu.VMEM((C, HW + 2 * W + 2), jnp.float32)],
        compiler_params=pltpu.CompilerParams(
            dimension_semantics=("parallel",),      # megacore-shards batch
            vmem_limit_bytes=_vmem_limit_bytes()),
    )(x_flat, w9, bconv, wh, bh)

    out = out[:, :n_head].reshape(N, n_head, H, W)   # drop pad rows -> NCHW
    return out[:, :A], out[:, A:]                    # (N, A, H, W), (N, 4A, H, W)


def rpn_head_forward(features, params):
    """features: list of NCHW arrays -> (list of logits, list of bbox_reg)."""
    # TODO(synk): pack all FPN levels into one pallas_call (lane-concat of the
    # per-level H*W with scalar-prefetched offsets) so single-TC v5e/v6e avoid
    # per-level launch overhead and sub-128-lane masked stores on small levels.
    logits, bbox_reg = [], []
    for feature in features:
        cls, box = _rpn_head_single(feature, params)
        logits.append(cls)
        bbox_reg.append(box)
    return logits, bbox_reg


def init_rpn_head_params(key, in_channels, num_anchors):
    """Deterministic init matching the module: normal(std=0.01) weights, 0 bias."""
    k1, k2, k3 = jax.random.split(key, 3)
    C, A = in_channels, num_anchors
    w_conv = 0.01 * jax.random.normal(k1, (C, C, 3, 3), jnp.float32)
    b_conv = jnp.zeros((C,), jnp.float32)
    w_cls = 0.01 * jax.random.normal(k2, (A, C, 1, 1), jnp.float32)
    b_cls = jnp.zeros((A,), jnp.float32)
    w_box = 0.01 * jax.random.normal(k3, (4 * A, C, 1, 1), jnp.float32)
    b_box = jnp.zeros((4 * A,), jnp.float32)
    return (w_conv, b_conv, w_cls, b_cls, w_box, b_box)


def _rpn_head_single_ref(x, params):
    """Pure-JAX reference (XLA convs) for correctness checking."""
    w_conv, b_conv, w_cls, b_cls, w_box, b_box = params
    dn = ('NCHW', 'OIHW', 'NCHW')
    t = jax.lax.conv_general_dilated(x, w_conv, (1, 1), 'SAME',
                                     dimension_numbers=dn)
    t = jnp.maximum(t + b_conv[None, :, None, None], 0.0)
    cls = jax.lax.conv_general_dilated(t, w_cls, (1, 1), 'VALID',
                                       dimension_numbers=dn)
    cls = cls + b_cls[None, :, None, None]
    box = jax.lax.conv_general_dilated(t, w_box, (1, 1), 'VALID',
                                       dimension_numbers=dn)
    box = box + b_box[None, :, None, None]
    return cls, box


if __name__ == "__main__":
    key = jax.random.PRNGKey(0)
    in_channels = 16
    num_anchors = 3

    pkey, xkey1, xkey2 = jax.random.split(key, 3)
    params = init_rpn_head_params(pkey, in_channels, num_anchors)

    # Two FPN-like feature levels, NCHW (PyTorch convention).
    features = [
        jax.random.normal(xkey1, (2, in_channels, 16, 16), jnp.float32),
        jax.random.normal(xkey2, (2, in_channels, 8, 8), jnp.float32),
    ]

    logits, bbox_reg = rpn_head_forward(features, params)
    jax.block_until_ready((logits, bbox_reg))

    # Verify against a pure-JAX reference.  bf16 MXU operands -> absolute
    # tolerance scaled with the conv contraction size K = 9*C.
    atol = 4e-4 * float(np.sqrt(9.0 * in_channels / 144.0))
    for feat, cls_out, box_out in zip(features, logits, bbox_reg):
        cls_ref, box_ref = _rpn_head_single_ref(feat, params)
        np.testing.assert_allclose(np.asarray(cls_out), np.asarray(cls_ref),
                                   rtol=2e-2, atol=atol)
        np.testing.assert_allclose(np.asarray(box_out), np.asarray(box_ref),
                                   rtol=2e-2, atol=atol)
        assert cls_out.shape == (feat.shape[0], num_anchors,
                                 feat.shape[2], feat.shape[3])
        assert box_out.shape == (feat.shape[0], 4 * num_anchors,
                                 feat.shape[2], feat.shape[3])

    print("KERNEL_OK")
</pallas_src>

<mosaic_0001>
module attributes {stable_mosaic.version = 11 : i64} {
  func.func @_rpn_head_kernel(%arg0: i32, %arg1: memref<1x16x256xf32, #tpu.memory_space<vmem>>, %arg2: memref<9x16x16xbf16, #tpu.memory_space<vmem>>, %arg3: memref<16x1xf32, #tpu.memory_space<vmem>>, %arg4: memref<16x16xbf16, #tpu.memory_space<vmem>>, %arg5: memref<16x1xf32, #tpu.memory_space<vmem>>, %arg6: memref<1x16x256xf32, #tpu.memory_space<vmem>>, %arg7: memref<16x290xf32, #tpu.memory_space<vmem>>) attributes {dimension_semantics = [#tpu.dimension_semantics<parallel>], iteration_bounds = array<i64: 2>, scalar_prefetch = 0 : i64, scratch_operands = 1 : i64, tpu.core_type = #tpu.core_type<tc>, window_params = [{transform_indices = @transform_0, window_bounds = array<i64: 1, 16, 256>}, {pipeline_mode = #tpu.pipeline_mode<synchronous>, transform_indices = @transform_1, window_bounds = array<i64: 9, 16, 16>}, {pipeline_mode = #tpu.pipeline_mode<synchronous>, transform_indices = @transform_2, window_bounds = array<i64: 16, 1>}, {pipeline_mode = #tpu.pipeline_mode<synchronous>, transform_indices = @transform_3, window_bounds = array<i64: 16, 16>}, {pipeline_mode = #tpu.pipeline_mode<synchronous>, transform_indices = @transform_4, window_bounds = array<i64: 16, 1>}, {transform_indices = @transform_5, window_bounds = array<i64: 1, 16, 256>}]} {
    %cst = arith.constant 0.000000e+00 : f32
    %0 = vector.broadcast %cst : f32 to vector<16x17xf32>
    %c0 = arith.constant 0 : index
    %c0_0 = arith.constant 0 : index
    %1 = vector.load %arg7[%c0, %c0_0] : memref<16x290xf32, #tpu.memory_space<vmem>>, vector<16x17xf32>
    tpu.vector_store %arg7[%c0, %c0_0], %0 {strides = array<i32>} : memref<16x290xf32, #tpu.memory_space<vmem>>, vector<16x17xf32>,
    %cst_1 = arith.constant 0.000000e+00 : f32
    %2 = vector.broadcast %cst_1 : f32 to vector<16x17xf32>
    %c0_2 = arith.constant 0 : index
    %c273 = arith.constant 273 : index
    %3 = vector.load %arg7[%c0_2, %c273] : memref<16x290xf32, #tpu.memory_space<vmem>>, vector<16x17xf32>
    tpu.vector_store %arg7[%c0_2, %c273], %2 {strides = array<i32>} : memref<16x290xf32, #tpu.memory_space<vmem>>, vector<16x17xf32>,
    %c0_3 = arith.constant 0 : index
    %c0_4 = arith.constant 0 : index
    %c0_5 = arith.constant 0 : index
    %4 = vector.load %arg1[%c0_3, %c0_4, %c0_5] : memref<1x16x256xf32, #tpu.memory_space<vmem>>, vector<1x16x256xf32>
    %5 = vector.shape_cast %4 : vector<1x16x256xf32> to vector<16x256xf32>
    %c0_6 = arith.constant 0 : index
    %c17 = arith.constant 17 : index
    %6 = vector.load %arg7[%c0_6, %c17] : memref<16x290xf32, #tpu.memory_space<vmem>>, vector<16x256xf32>
    tpu.vector_store %arg7[%c0_6, %c17], %5 {strides = array<i32>} : memref<16x290xf32, #tpu.memory_space<vmem>>, vector<16x256xf32>,
    %7 = tpu.iota {dimensions = array<i32: 1>} : vector<1x256xi32>
    %c16_i32 = arith.constant 16 : i32
    %c0_i32 = arith.constant 0 : i32
    %8 = arith.cmpi eq, %c16_i32, %c0_i32 : i32
    %c1_i32 = arith.constant 1 : i32
    %9 = arith.select %8, %c1_i32, %c16_i32 : i32
    %10 = vector.broadcast %9 : i32 to vector<1x256xi32>
    %11 = arith.remsi %7, %10 : vector<1x256xi32>
    %c0_i32_7 = arith.constant 0 : i32
    %12 = vector.broadcast %c0_i32_7 : i32 to vector<1x256xi32>
    %13 = arith.cmpi ne, %11, %12 : vector<1x256xi32>
    %c0_i32_8 = arith.constant 0 : i32
    %14 = vector.broadcast %c0_i32_8 : i32 to vector<1x256xi32>
    %15 = arith.cmpi slt, %11, %14 : vector<1x256xi32>
    %c0_i32_9 = arith.constant 0 : i32
    %16 = arith.cmpi slt, %9, %c0_i32_9 : i32
    %17 = vector.broadcast %16 : i1 to vector<1x256xi1>
    %18 = vector.broadcast %17 : vector<1x256xi1> to vector<1x256xi1>
    %19 = arith.xori %15, %18 : vector<1x256xi1>
    %20 = arith.andi %19, %13 : vector<1x256xi1>
    %21 = vector.broadcast %9 : i32 to vector<1x256xi32>
    %22 = arith.addi %11, %21 : vector<1x256xi32>
    %23 = arith.select %20, %22, %11 : vector<1x256xi1>, vector<1x256xi32>
    %c1_i32_10 = arith.constant 1 : i32
    %24 = vector.broadcast %c1_i32_10 : i32 to vector<1x256xi32>
    %25 = arith.cmpi sge, %23, %24 : vector<1x256xi32>
    %c15_i32 = arith.constant 15 : i32
    %26 = vector.broadcast %c15_i32 : i32 to vector<1x256xi32>
    %27 = arith.cmpi slt, %23, %26 : vector<1x256xi32>
    %c0_11 = arith.constant 0 : index
    %c0_12 = arith.constant 0 : index
    %28 = vector.load %arg7[%c0_11, %c0_12] : memref<16x290xf32, #tpu.memory_space<vmem>>, vector<16x256xf32>
    %cst_13 = arith.constant 0.000000e+00 : f32
    %29 = vector.shape_cast %25 : vector<1x256xi1> to vector<1x256xi1>
    %30 = vector.broadcast %29 : vector<1x256xi1> to vector<16x256xi1>
    %31 = vector.broadcast %cst_13 : f32 to vector<16x256xf32>
    %32 = arith.select %30, %28, %31 : vector<16x256xi1>, vector<16x256xf32>
    %c0_14 = arith.constant 0 : index
    %c0_15 = arith.constant 0 : index
    %c0_16 = arith.constant 0 : index
    %33 = vector.load %arg2[%c0_14, %c0_15, %c0_16] : memref<9x16x16xbf16, #tpu.memory_space<vmem>>, vector<1x16x16xbf16>
    %34 = vector.shape_cast %33 : vector<1x16x16xbf16> to vector<16x16xbf16>
    %35 = arith.truncf %32 : vector<16x256xf32> to vector<16x256xbf16>
    %cst_17 = arith.constant dense<0.000000e+00> : vector<16x256xf32>
    %36 = tpu.matmul %34, %35, %cst_17 {dimension_numbers = #tpu.dot_dimension_numbers<[1], [0], [0], [1], [0, 0, 1, 1], [], []>} : vector<16x16xbf16>, vector<16x256xbf16>, vector<16x256xf32> -> vector<16x256xf32>
    %c0_18 = arith.constant 0 : index
    %c1 = arith.constant 1 : index
    %37 = vector.load %arg7[%c0_18, %c1] : memref<16x290xf32, #tpu.memory_space<vmem>>, vector<16x256xf32>
    %c1_19 = arith.constant 1 : index
    %c0_20 = arith.constant 0 : index
    %c0_21 = arith.constant 0 : index
    %38 = vector.load %arg2[%c1_19, %c0_20, %c0_21] : memref<9x16x16xbf16, #tpu.memory_space<vmem>>, vector<1x16x16xbf16>
    %39 = vector.shape_cast %38 : vector<1x16x16xbf16> to vector<16x16xbf16>
    %40 = arith.truncf %37 : vector<16x256xf32> to vector<16x256xbf16>
    %cst_22 = arith.constant dense<0.000000e+00> : vector<16x256xf32>
    %41 = tpu.matmul %39, %40, %cst_22 {dimension_numbers = #tpu.dot_dimension_numbers<[1], [0], [0], [1], [0, 0, 1, 1], [], []>} : vector<16x16xbf16>, vector<16x256xbf16>, vector<16x256xf32> -> vector<16x256xf32>
    %42 = arith.addf %36, %41 : vector<16x256xf32>
    %c0_23 = arith.constant 0 : index
    %c2 = arith.constant 2 : index
    %43 = vector.load %arg7[%c0_23, %c2] : memref<16x290xf32, #tpu.memory_space<vmem>>, vector<16x256xf32>
    %cst_24 = arith.constant 0.000000e+00 : f32
    %44 = vector.shape_cast %27 : vector<1x256xi1> to vector<1x256xi1>
    %45 = vector.broadcast %44 : vector<1x256xi1> to vector<16x256xi1>
    %46 = vector.broadcast %cst_24 : f32 to vector<16x256xf32>
    %47 = arith.select %45, %43, %46 : vector<16x256xi1>, vector<16x256xf32>
    %c2_25 = arith.constant 2 : index
    %c0_26 = arith.constant 0 : index
    %c0_27 = arith.constant 0 : index
    %48 = vector.load %arg2[%c2_25, %c0_26, %c0_27] : memref<9x16x16xbf16, #tpu.memory_space<vmem>>, vector<1x16x16xbf16>
    %49 = vector.shape_cast %48 : vector<1x16x16xbf16> to vector<16x16xbf16>
    %50 = arith.truncf %47 : vector<16x256xf32> to vector<16x256xbf16>
    %cst_28 = arith.constant dense<0.000000e+00> : vector<16x256xf32>
    %51 = tpu.matmul %49, %50, %cst_28 {dimension_numbers = #tpu.dot_dimension_numbers<[1], [0], [0], [1], [0, 0, 1, 1], [], []>} : vector<16x16xbf16>, vector<16x256xbf16>, vector<16x256xf32> -> vector<16x256xf32>
    %52 = arith.addf %42, %51 : vector<16x256xf32>
    %c0_29 = arith.constant 0 : index
    %c16 = arith.constant 16 : index
    %53 = vector.load %arg7[%c0_29, %c16] : memref<16x290xf32, #tpu.memory_space<vmem>>, vector<16x256xf32>
    %cst_30 = arith.constant 0.000000e+00 : f32
    %54 = vector.shape_cast %25 : vector<1x256xi1> to vector<1x256xi1>
    %55 = vector.broadcast %54 : vector<1x256xi1> to vector<16x256xi1>
    %56 = vector.broadcast %cst_30 : f32 to vector<16x256xf32>
    %57 = arith.select %55, %53, %56 : vector<16x256xi1>, vector<16x256xf32>
    %c3 = arith.constant 3 : index
    %c0_31 = arith.constant 0 : index
    %c0_32 = arith.constant 0 : index
    %58 = vector.load %arg2[%c3, %c0_31, %c0_32] : memref<9x16x16xbf16, #tpu.memory_space<vmem>>, vector<1x16x16xbf16>
    %59 = vector.shape_cast %58 : vector<1x16x16xbf16> to vector<16x16xbf16>
    %60 = arith.truncf %57 : vector<16x256xf32> to vector<16x256xbf16>
    %cst_33 = arith.constant dense<0.000000e+00> : vector<16x256xf32>
    %61 = tpu.matmul %59, %60, %cst_33 {dimension_numbers = #tpu.dot_dimension_numbers<[1], [0], [0], [1], [0, 0, 1, 1], [], []>} : vector<16x16xbf16>, vector<16x256xbf16>, vector<16x256xf32> -> vector<16x256xf32>
    %62 = arith.addf %52, %61 : vector<16x256xf32>
    %c0_34 = arith.constant 0 : index
    %c17_35 = arith.constant 17 : index
    %63 = vector.load %arg7[%c0_34, %c17_35] : memref<16x290xf32, #tpu.memory_space<vmem>>, vector<16x256xf32>
    %c4 = arith.constant 4 : index
    %c0_36 = arith.constant 0 : index
    %c0_37 = arith.constant 0 : index
    %64 = vector.load %arg2[%c4, %c0_36, %c0_37] : memref<9x16x16xbf16, #tpu.memory_space<vmem>>, vector<1x16x16xbf16>
    %65 = vector.shape_cast %64 : vector<1x16x16xbf16> to vector<16x16xbf16>
    %66 = arith.truncf %63 : vector<16x256xf32> to vector<16x256xbf16>
    %cst_38 = arith.constant dense<0.000000e+00> : vector<16x256xf32>
    %67 = tpu.matmul %65, %66, %cst_38 {dimension_numbers = #tpu.dot_dimension_numbers<[1], [0], [0], [1], [0, 0, 1, 1], [], []>} : vector<16x16xbf16>, vector<16x256xbf16>, vector<16x256xf32> -> vector<16x256xf32>
    %68 = arith.addf %62, %67 : vector<16x256xf32>
    %c0_39 = arith.constant 0 : index
    %c18 = arith.constant 18 : index
    %69 = vector.load %arg7[%c0_39, %c18] : memref<16x290xf32, #tpu.memory_space<vmem>>, vector<16x256xf32>
    %cst_40 = arith.constant 0.000000e+00 : f32
    %70 = vector.shape_cast %27 : vector<1x256xi1> to vector<1x256xi1>
    %71 = vector.broadcast %70 : vector<1x256xi1> to vector<16x256xi1>
    %72 = vector.broadcast %cst_40 : f32 to vector<16x256xf32>
    %73 = arith.select %71, %69, %72 : vector<16x256xi1>, vector<16x256xf32>
    %c5 = arith.constant 5 : index
    %c0_41 = arith.constant 0 : index
    %c0_42 = arith.constant 0 : index
    %74 = vector.load %arg2[%c5, %c0_41, %c0_42] : memref<9x16x16xbf16, #tpu.memory_space<vmem>>, vector<1x16x16xbf16>
    %75 = vector.shape_cast %74 : vector<1x16x16xbf16> to vector<16x16xbf16>
    %76 = arith.truncf %73 : vector<16x256xf32> to vector<16x256xbf16>
    %cst_43 = arith.constant dense<0.000000e+00> : vector<16x256xf32>
    %77 = tpu.matmul %75, %76, %cst_43 {dimension_numbers = #tpu.dot_dimension_numbers<[1], [0], [0], [1], [0, 0, 1, 1], [], []>} : vector<16x16xbf16>, vector<16x256xbf16>, vector<16x256xf32> -> vector<16x256xf32>
    %78 = arith.addf %68, %77 : vector<16x256xf32>
    %c0_44 = arith.constant 0 : index
    %c32 = arith.constant 32 : index
    %79 = vector.load %arg7[%c0_44, %c32] : memref<16x290xf32, #tpu.memory_space<vmem>>, vector<16x256xf32>
    %cst_45 = arith.constant 0.000000e+00 : f32
    %80 = vector.shape_cast %25 : vector<1x256xi1> to vector<1x256xi1>
    %81 = vector.broadcast %80 : vector<1x256xi1> to vector<16x256xi1>
    %82 = vector.broadcast %cst_45 : f32 to vector<16x256xf32>
    %83 = arith.select %81, %79, %82 : vector<16x256xi1>, vector<16x256xf32>
    %c6 = arith.constant 6 : index
    %c0_46 = arith.constant 0 : index
    %c0_47 = arith.constant 0 : index
    %84 = vector.load %arg2[%c6, %c0_46, %c0_47] : memref<9x16x16xbf16, #tpu.memory_space<vmem>>, vector<1x16x16xbf16>
    %85 = vector.shape_cast %84 : vector<1x16x16xbf16> to vector<16x16xbf16>
    %86 = arith.truncf %83 : vector<16x256xf32> to vector<16x256xbf16>
    %cst_48 = arith.constant dense<0.000000e+00> : vector<16x256xf32>
    %87 = tpu.matmul %85, %86, %cst_48 {dimension_numbers = #tpu.dot_dimension_numbers<[1], [0], [0], [1], [0, 0, 1, 1], [], []>} : vector<16x16xbf16>, vector<16x256xbf16>, vector<16x256xf32> -> vector<16x256xf32>
    %88 = arith.addf %78, %87 : vector<16x256xf32>
    %c0_49 = arith.constant 0 : index
    %c33 = arith.constant 33 : index
    %89 = vector.load %arg7[%c0_49, %c33] : memref<16x290xf32, #tpu.memory_space<vmem>>, vector<16x256xf32>
    %c7 = arith.constant 7 : index
    %c0_50 = arith.constant 0 : index
    %c0_51 = arith.constant 0 : index
    %90 = vector.load %arg2[%c7, %c0_50, %c0_51] : memref<9x16x16xbf16, #tpu.memory_space<vmem>>, vector<1x16x16xbf16>
    %91 = vector.shape_cast %90 : vector<1x16x16xbf16> to vector<16x16xbf16>
    %92 = arith.truncf %89 : vector<16x256xf32> to vector<16x256xbf16>
    %cst_52 = arith.constant dense<0.000000e+00> : vector<16x256xf32>
    %93 = tpu.matmul %91, %92, %cst_52 {dimension_numbers = #tpu.dot_dimension_numbers<[1], [0], [0], [1], [0, 0, 1, 1], [], []>} : vector<16x16xbf16>, vector<16x256xbf16>, vector<16x256xf32> -> vector<16x256xf32>
    %94 = arith.addf %88, %93 : vector<16x256xf32>
    %c0_53 = arith.constant 0 : index
    %c34 = arith.constant 34 : index
    %95 = vector.load %arg7[%c0_53, %c34] : memref<16x290xf32, #tpu.memory_space<vmem>>, vector<16x256xf32>
    %cst_54 = arith.constant 0.000000e+00 : f32
    %96 = vector.shape_cast %27 : vector<1x256xi1> to vector<1x256xi1>
    %97 = vector.broadcast %96 : vector<1x256xi1> to vector<16x256xi1>
    %98 = vector.broadcast %cst_54 : f32 to vector<16x256xf32>
    %99 = arith.select %97, %95, %98 : vector<16x256xi1>, vector<16x256xf32>
    %c8 = arith.constant 8 : index
    %c0_55 = arith.constant 0 : index
    %c0_56 = arith.constant 0 : index
    %100 = vector.load %arg2[%c8, %c0_55, %c0_56] : memref<9x16x16xbf16, #tpu.memory_space<vmem>>, vector<1x16x16xbf16>
    %101 = vector.shape_cast %100 : vector<1x16x16xbf16> to vector<16x16xbf16>
    %102 = arith.truncf %99 : vector<16x256xf32> to vector<16x256xbf16>
    %cst_57 = arith.constant dense<0.000000e+00> : vector<16x256xf32>
    %103 = tpu.matmul %101, %102, %cst_57 {dimension_numbers = #tpu.dot_dimension_numbers<[1], [0], [0], [1], [0, 0, 1, 1], [], []>} : vector<16x16xbf16>, vector<16x256xbf16>, vector<16x256xf32> -> vector<16x256xf32>
    %104 = arith.addf %94, %103 : vector<16x256xf32>
    %c0_58 = arith.constant 0 : index
    %c0_59 = arith.constant 0 : index
    %105 = vector.load %arg3[%c0_58, %c0_59] : memref<16x1xf32, #tpu.memory_space<vmem>>, vector<16x1xf32>
    %106 = vector.broadcast %105 : vector<16x1xf32> to vector<16x256xf32>
    %107 = arith.addf %104, %106 : vector<16x256xf32>
    %cst_60 = arith.constant 0.000000e+00 : f32
    %108 = vector.broadcast %cst_60 : f32 to vector<16x256xf32>
    %109 = arith.maximumf %107, %108 : vector<16x256xf32>
    %c0_61 = arith.constant 0 : index
    %c0_62 = arith.constant 0 : index
    %110 = vector.load %arg4[%c0_61, %c0_62] : memref<16x16xbf16, #tpu.memory_space<vmem>>, vector<16x16xbf16>
    %111 = arith.truncf %109 : vector<16x256xf32> to vector<16x256xbf16>
    %cst_63 = arith.constant dense<0.000000e+00> : vector<16x256xf32>
    %112 = tpu.matmul %110, %111, %cst_63 {dimension_numbers = #tpu.dot_dimension_numbers<[1], [0], [0], [1], [0, 0, 1, 1], [], []>} : vector<16x16xbf16>, vector<16x256xbf16>, vector<16x256xf32> -> vector<16x256xf32>
    %c0_64 = arith.constant 0 : index
    %c0_65 = arith.constant 0 : index
    %113 = vector.load %arg5[%c0_64, %c0_65] : memref<16x1xf32, #tpu.memory_space<vmem>>, vector<16x1xf32>
    %114 = vector.broadcast %113 : vector<16x1xf32> to vector<16x256xf32>
    %115 = arith.addf %112, %114 : vector<16x256xf32>
    %c0_66 = arith.constant 0 : index
    %c0_67 = arith.constant 0 : index
    %c0_68 = arith.constant 0 : index
    %116 = vector.load %arg6[%c0_66, %c0_67, %c0_68] : memref<1x16x256xf32, #tpu.memory_space<vmem>>, vector<1x16x256xf32>
    %117 = vector.shape_cast %116 : vector<1x16x256xf32> to vector<16x256xf32>
    %118 = vector.shape_cast %115 : vector<16x256xf32> to vector<1x16x256xf32>
    tpu.vector_store %arg6[%c0_66, %c0_67, %c0_68], %118 {strides = array<i32>} : memref<1x16x256xf32, #tpu.memory_space<vmem>>, vector<1x16x256xf32>,
    return
  }
  func.func @transform_0(%arg0: i32) -> (i32, i32, i32) {
    %c0_i32 = arith.constant 0 : i32
    %c0_i32_0 = arith.constant 0 : i32
    %c0_i32_1 = arith.constant 0 : i32
    return %arg0, %c0_i32, %c0_i32_0 : i32, i32, i32
  }
  func.func @transform_1(%arg0: i32) -> (i32, i32, i32) {
    %c0_i32 = arith.constant 0 : i32
    %c0_i32_0 = arith.constant 0 : i32
    %c0_i32_1 = arith.constant 0 : i32
    %c0_i32_2 = arith.constant 0 : i32
    return %c0_i32, %c0_i32_0, %c0_i32_1 : i32, i32, i32
  }
  func.func @transform_2(%arg0: i32) -> (i32, i32) {
    %c0_i32 = arith.constant 0 : i32
    %c0_i32_0 = arith.constant 0 : i32
    %c0_i32_1 = arith.constant 0 : i32
    return %c0_i32, %c0_i32_0 : i32, i32
  }
  func.func @transform_3(%arg0: i32) -> (i32, i32) {
    %c0_i32 = arith.constant 0 : i32
    %c0_i32_0 = arith.constant 0 : i32
    %c0_i32_1 = arith.constant 0 : i32
    return %c0_i32, %c0_i32_0 : i32, i32
  }
  func.func @transform_4(%arg0: i32) -> (i32, i32) {
    %c0_i32 = arith.constant 0 : i32
    %c0_i32_0 = arith.constant 0 : i32
    %c0_i32_1 = arith.constant 0 : i32
    return %c0_i32, %c0_i32_0 : i32, i32
  }
  func.func @transform_5(%arg0: i32) -> (i32, i32, i32) {
    %c0_i32 = arith.constant 0 : i32
    %c0_i32_0 = arith.constant 0 : i32
    %c0_i32_1 = arith.constant 0 : i32
    return %arg0, %c0_i32, %c0_i32_0 : i32, i32, i32
  }
}

</mosaic_0001>

<llo_original>
// kernel: tpu_custom_call.1
$region0: #{tpu_custom_call.1}
  #allocation0 [shape = 'u32[]', space=smem, size = 0x4, offset = 0x4, fixed_abs, tag = 'smem constant byte address 0x4 - core index']
  #allocation1 [shape = 'u32[72,128]{1,0:T(1,128)}', space=vmem, size = 0x9000, scoped, tag = 'internal scratch']
  #allocation2 [shape = 'f32[16,290]{1,0:T(8,128)}', space=vmem, size = 0x6000, scoped, tag = 'scratch operand']
  %s0 = inlined_call_operand.hbm [shape: f32[2,16,256], index: 0, kind: input, shape index: {}]
  %s1 = inlined_call_operand.hbm [shape: bf16[9,16,16], index: 1, kind: input, shape index: {}]
  %s2 = inlined_call_operand.vmem [shape: f32[16,1], index: 2, kind: input, shape index: {}]
  %s3 = inlined_call_operand.vmem [shape: bf16[16,16], index: 3, kind: input, shape index: {}]
  %s4 = inlined_call_operand.vmem [shape: f32[16,1], index: 4, kind: input, shape index: {}]
  %s5 = inlined_call_operand.hbm [shape: f32[2,16,256], index: 5, kind: output, shape index: {}]
  %s6 = sld [smem:[#allocation0]]
  $region61: #{tpu_custom_call.1} parent=0
    _
  %s8 = ssub.s32 1, %s6
  %s9 = scalar_select 0, %s8, %s6
  $region1: #{tpu_custom_call.1} parent=0
    #allocation3 [shape = 'u8[32768]{0}', space=vmem, size = 0x8000, scoped, tag = 'input window, operand 0']
    #allocation4 [shape = 's32[2]{0}', space=sflag, size = 0x8, scoped, tag = 'scoped memory for tpu_custom_call.1']
    #allocation5 [shape = 's32[2]{0}', space=sflag, size = 0x8, scoped, tag = 'scoped memory for tpu_custom_call.1']
    #allocation6 [shape = 'u8[36864]{0}', space=vmem, size = 0x9000, scoped, tag = 'input window, operand 1, single buffered']
    #allocation7 [shape = 's32[1]{0}', space=sflag, size = 0x4, scoped, tag = 'scoped memory for tpu_custom_call.1']
    #allocation8 [shape = 'u8[32768]{0}', space=vmem, size = 0x8000, scoped, tag = 'output window, operand 0']
    %10 = vsyncpa [#allocation4], 0
    %s11 = scalar_lea.sflag [#allocation4], 1
    %12 = vsyncpa %s11, 0
    %13 = vsyncpa [#allocation7], 0
    %14 = vsyncpa [#allocation5], 0
    %s15 = scalar_lea.sflag [#allocation5], 1
    %16 = vsyncpa %s15, 0
    loop: start=0, step=1, limit=4
    $region2: #{tpu_custom_call.1} parent=1 // loop_pre_header
      _
    $region3: #{tpu_custom_call.1} parent=1 // loop_header
      %s18 = sphi 0, %s22
      %p19 = scmp.ge.s32.totalorder %s18, 4
      %s28 = sphi 0, %s30
      %s31 = sphi 0, %s28
      %s32 = sphi 0, %s31
      %s48 = sphi 0, %s32
      %s52 = sphi 0, %s52
      %s54 = sphi 0, %s52
      %s55 = sphi 0, %s54
      %s69 = sphi 0, %s55
      %s73 = sphi 0, %s73
      %s75 = sphi 0, %s73
      %s76 = sphi 0, %s75
      %s90 = sphi 0, %s76
      %s94 = sphi 0, %s94
      %s96 = sphi 0, %s94
      %s97 = sphi 0, %s96
      %s111 = sphi 0, %s97
      %s115 = sphi 0, %s115
      %s117 = sphi 0, %s115
      %s118 = sphi 0, %s117
      %s132 = sphi 0, %s118
      %s138 = sphi 0, %s140
      %s141 = sphi 0, %s138
      %s142 = sphi 0, %s141
      %s158 = sphi 0, %s142
    $region4: #{tpu_custom_call.1} parent=1 // loop_header_branch
      %21 = sbr.rel (%p19) target = $region8
    $region5: #{tpu_custom_call.1} parent=1 // loop_body
      %s23 = ssub.s32 %s18, 1
      %s24 = ssub.s32 %s18, 2
      %s25 = sadd.s32 %s18, 1
      %s26 = ssub.s32 %s18, %s25
      %p27 = scmp.eq.s32.totalorder %s26, 0
      %s29 = sadd.s32 %s28, 1
      %s30 = scalar_select %p27, %s28, %s29
      %p33 = pneg %p27
      %p34 = scmp.eq.s32.totalorder %s18, 1
      %p35 = por %p33, %p34
      %p36 = scmp.ne.s32.totalorder %s28, %s31
      %p37 = scmp.eq.s32.totalorder %s18, 0
      %p38 = por %p36, %p37
      %p39 = scmp.ne.s32.totalorder %s28, %s31
      %p40 = scmp.eq.s32.totalorder %s23, 1
      %p41 = por %p39, %p40
      %p42 = scmp.ne.s32.totalorder %s31, %s32
      %p43 = scmp.eq.s32.totalorder %s23, 0
      %p44 = por %p42, %p43
      %p45 = scmp.ne.s32.totalorder %s31, %s32
      %p46 = scmp.eq.s32.totalorder %s24, 1
      %p47 = por %p45, %p46
      %p49 = scmp.ne.s32.totalorder %s32, %s48
      %p50 = scmp.eq.s32.totalorder %s24, 0
      %p51 = por %p49, %p50
      %s53 = sadd.s32 %s52, 1
      %p56 = scmp.eq.s32.totalorder %s18, 1
      %p57 = scmp.ne.s32.totalorder %s52, %s54
      %p58 = scmp.eq.s32.totalorder %s18, 0
      %p59 = por %p57, %p58
      %p60 = scmp.ne.s32.totalorder %s52, %s54
      %p61 = scmp.eq.s32.totalorder %s23, 1
      %p62 = por %p60, %p61
      %p63 = scmp.ne.s32.totalorder %s54, %s55
      %p64 = scmp.eq.s32.totalorder %s23, 0
      %p65 = por %p63, %p64
      %p66 = scmp.ne.s32.totalorder %s54, %s55
      %p67 = scmp.eq.s32.totalorder %s24, 1
      %p68 = por %p66, %p67
      %p70 = scmp.ne.s32.totalorder %s55, %s69
      %p71 = scmp.eq.s32.totalorder %s24, 0
      %p72 = por %p70, %p71
      %s74 = sadd.s32 %s73, 1
      %p77 = scmp.eq.s32.totalorder %s18, 1
      %p78 = scmp.ne.s32.totalorder %s73, %s75
      %p79 = scmp.eq.s32.totalorder %s18, 0
      %p80 = por %p78, %p79
      %p81 = scmp.ne.s32.totalorder %s73, %s75
      %p82 = scmp.eq.s32.totalorder %s23, 1
      %p83 = por %p81, %p82
      %p84 = scmp.ne.s32.totalorder %s75, %s76
      %p85 = scmp.eq.s32.totalorder %s23, 0
      %p86 = por %p84, %p85
      %p87 = scmp.ne.s32.totalorder %s75, %s76
      %p88 = scmp.eq.s32.totalorder %s24, 1
      %p89 = por %p87, %p88
      %p91 = scmp.ne.s32.totalorder %s76, %s90
      %p92 = scmp.eq.s32.totalorder %s24, 0
      %p93 = por %p91, %p92
      %s95 = sadd.s32 %s94, 1
      %p98 = scmp.eq.s32.totalorder %s18, 1
      %p99 = scmp.ne.s32.totalorder %s94, %s96
      %p100 = scmp.eq.s32.totalorder %s18, 0
      %p101 = por %p99, %p100
      %p102 = scmp.ne.s32.totalorder %s94, %s96
      %p103 = scmp.eq.s32.totalorder %s23, 1
      %p104 = por %p102, %p103
      %p105 = scmp.ne.s32.totalorder %s96, %s97
      %p106 = scmp.eq.s32.totalorder %s23, 0
      %p107 = por %p105, %p106
      %p108 = scmp.ne.s32.totalorder %s96, %s97
      %p109 = scmp.eq.s32.totalorder %s24, 1
      %p110 = por %p108, %p109
      %p112 = scmp.ne.s32.totalorder %s97, %s111
      %p113 = scmp.eq.s32.totalorder %s24, 0
      %p114 = por %p112, %p113
      %s116 = sadd.s32 %s115, 1
      %p119 = scmp.eq.s32.totalorder %s18, 1
      %p120 = scmp.ne.s32.totalorder %s115, %s117
      %p121 = scmp.eq.s32.totalorder %s18, 0
      %p122 = por %p120, %p121
      %p123 = scmp.ne.s32.totalorder %s115, %s117
      %p124 = scmp.eq.s32.totalorder %s23, 1
      %p125 = por %p123, %p124
      %p126 = scmp.ne.s32.totalorder %s117, %s118
      %p127 = scmp.eq.s32.totalorder %s23, 0
      %p128 = por %p126, %p127
      %p129 = scmp.ne.s32.totalorder %s117, %s118
      %p130 = scmp.eq.s32.totalorder %s24, 1
      %p131 = por %p129, %p130
      %p133 = scmp.ne.s32.totalorder %s118, %s132
      %p134 = scmp.eq.s32.totalorder %s24, 0
      %p135 = por %p133, %p134
      %s136 = ssub.s32 %s18, %s25
      %p137 = scmp.eq.s32.totalorder %s136, 0
      %s139 = sadd.s32 %s138, 1
      %s140 = scalar_select %p137, %s138, %s139
      %p143 = pneg %p137
      %p144 = scmp.eq.s32.totalorder %s18, 1
      %p145 = por %p143, %p144
      %p146 = scmp.ne.s32.totalorder %s138, %s141
      %p147 = scmp.eq.s32.totalorder %s18, 0
      %p148 = por %p146, %p147
      %p149 = scmp.ne.s32.totalorder %s138, %s141
      %p150 = scmp.eq.s32.totalorder %s23, 1
      %p151 = por %p149, %p150
      %p152 = scmp.ne.s32.totalorder %s141, %s142
      %p153 = scmp.eq.s32.totalorder %s23, 0
      %p154 = por %p152, %p153
      %p155 = scmp.ne.s32.totalorder %s141, %s142
      %p156 = scmp.eq.s32.totalorder %s24, 1
      %p157 = por %p155, %p156
      %p159 = scmp.ne.s32.totalorder %s142, %s158
      %p160 = scmp.eq.s32.totalorder %s24, 0
      %p161 = por %p159, %p160
      %p162 = scmp.le.s32.totalorder 1, %s18
      %p163 = scmp.lt.s32.totalorder %s18, 3
      %p164 = pnand %p162, %p163
      %p165 = pneg %p164
      // Predicated region
      $region9: #{tpu_custom_call.1} parent=5 // pred_check
        _
      $region10: #{tpu_custom_call.1} parent=5 // pred_check_branch
        %167 = sbr.rel (%p164) target = $region12
      $region11: #{tpu_custom_call.1} parent=5 // pred_region
        %s168 = ssub.s32 %s18, 1
        // Predicated region
        $region13: #{tpu_custom_call.1} parent=11 // pred_check
          %p169 = pneg %p65
        $region14: #{tpu_custom_call.1} parent=11 // pred_check_branch
          %171 = sbr.rel (%p169) target = $region16
        $region15: #{tpu_custom_call.1} parent=11 // pred_region
          %173 = vsyncadd [#allocation7], 0
          %s174 = sshll.u32 %s1, 4
          %s175 = int_to_ptr.hbm [resolvable:$true] %s174
          %s176 = sshll.u32 [#allocation6], 4
          %s177 = int_to_ptr.vmem [resolvable:$true] %s176
          %182 = dma.hbm_to_vmem [thread:$0]  %s175, 1152, %s177, [#allocation7], 64, 64, 4
        $region16: #{tpu_custom_call.1} parent=11 // pred_fallthru
          _
        // Predicated region
        $region17: #{tpu_custom_call.1} parent=11 // pred_check
          %p183 = pneg %p86
        $region18: #{tpu_custom_call.1} parent=11 // pred_check_branch
          %185 = sbr.rel (%p183) target = $region20
        $region19: #{tpu_custom_call.1} parent=11 // pred_region
          _
        $region20: #{tpu_custom_call.1} parent=11 // pred_fallthru
          _
        // Predicated region
        $region21: #{tpu_custom_call.1} parent=11 // pred_check
          %p186 = pneg %p107
        $region22: #{tpu_custom_call.1} parent=11 // pred_check_branch
          %188 = sbr.rel (%p186) target = $region24
        $region23: #{tpu_custom_call.1} parent=11 // pred_region
          _
        $region24: #{tpu_custom_call.1} parent=11 // pred_fallthru
          _
        // Predicated region
        $region25: #{tpu_custom_call.1} parent=11 // pred_check
          %p189 = pneg %p128
        $region26: #{tpu_custom_call.1} parent=11 // pred_check_branch
          %191 = sbr.rel (%p189) target = $region28
        $region27: #{tpu_custom_call.1} parent=11 // pred_region
          _
        $region28: #{tpu_custom_call.1} parent=11 // pred_fallthru
          _
      $region12: #{tpu_custom_call.1} parent=5 // pred_fallthru
        _
      %p192 = scmp.lt.s32.totalorder %s18, 2
      // Predicated region
      $region29: #{tpu_custom_call.1} parent=5 // pred_check
        %p193 = pneg %p192
      $region30: #{tpu_custom_call.1} parent=5 // pred_check_branch
        %195 = sbr.rel (%p193) target = $region32
      $region31: #{tpu_custom_call.1} parent=5 // pred_region
        // Predicated region
        $region33: #{tpu_custom_call.1} parent=31 // pred_check
          %p196 = pneg %p38
        $region34: #{tpu_custom_call.1} parent=31 // pred_check_branch
          %198 = sbr.rel (%p196) target = $region36
        $region35: #{tpu_custom_call.1} parent=31 // pred_region
          %s199 = sand.u32 %s28, 1
          %s200 = scalar_lea.sflag [#allocation4], %s199
          %s201 = sand.u32 %s28, 1
          %s202 = smul.addr %s201, 32
          %s203 = scalar_lea.vmem [#allocation3], %s202
          %205 = vsyncadd %s200, 0
          %s206 = smul.addr %s18, 4
          %s207 = smul.addr %s206, 8
          %s208 = scalar_lea.hbm %s0, %s207
          %s209 = sshll.u32 %s208, 4
          %s210 = int_to_ptr.hbm [resolvable:$true] %s209
          %s211 = sshll.u32 %s203, 4
          %s212 = int_to_ptr.vmem [resolvable:$true] %s211
          %217 = dma.hbm_to_vmem [thread:$0]  %s210, 512, %s212, %s200, 256, 256, 16
        $region36: #{tpu_custom_call.1} parent=31 // pred_fallthru
          _
      $region32: #{tpu_custom_call.1} parent=5 // pred_fallthru
        _
      %p218 = scmp.le.s32.totalorder 1, %s18
      %p219 = scmp.lt.s32.totalorder %s18, 3
      %p220 = pnand %p218, %p219
      %p221 = pneg %p220
      // Predicated region
      $region37: #{tpu_custom_call.1} parent=5 // pred_check
        _
      $region38: #{tpu_custom_call.1} parent=5 // pred_check_branch
        %223 = sbr.rel (%p220) target = $region40
      $region39: #{tpu_custom_call.1} parent=5 // pred_region
        %s224 = ssub.s32 %s18, 1
        %s225 = sand.u32 %s31, 1
        %s226 = scalar_lea.sflag [#allocation4], %s225
        %s227 = sand.u32 %s31, 1
        %s228 = smul.addr %s227, 32
        %s229 = scalar_lea.vmem [#allocation3], %s228
        // Predicated region
        $region41: #{tpu_custom_call.1} parent=39 // pred_check
          %p230 = pneg %p44
        $region42: #{tpu_custom_call.1} parent=39 // pred_check_branch
          %232 = sbr.rel (%p230) target = $region44
        $region43: #{tpu_custom_call.1} parent=39 // pred_region
          %234 = dma.done %s226, 512
        $region44: #{tpu_custom_call.1} parent=39 // pred_fallthru
          _
        // Predicated region
        $region45: #{tpu_custom_call.1} parent=39 // pred_check
          %p235 = pneg %p65
        $region46: #{tpu_custom_call.1} parent=39 // pred_check_branch
          %237 = sbr.rel (%p235) target = $region48
        $region47: #{tpu_custom_call.1} parent=39 // pred_region
          %239 = dma.done [#allocation7], 1152
        $region48: #{tpu_custom_call.1} parent=39 // pred_fallthru
          _
        %s240 = sand.u32 %s31, 1
        %s241 = scalar_lea.sflag [#allocation4], %s240
        %s242 = sand.u32 %s31, 1
        %s243 = smul.addr %s242, 32
        %s244 = scalar_lea.vmem [#allocation3], %s243
        %p245 = pneg %p44
        %p246 = pneg %p41
        %p247 = pneg %p65
        %p248 = pneg %p62
        %p249 = pneg %p86
        %p250 = pneg %p83
        %p251 = pneg %p107
        %p252 = pneg %p104
        %p253 = pneg %p128
        %p254 = pneg %p125
        %p255 = pneg %p154
        %p256 = pneg %p151
        %s257 = sand.u32 %s141, 1
        %s258 = scalar_lea.sflag [#allocation5], %s257
        %s259 = sand.u32 %s141, 1
        %s260 = smul.addr %s259, 32
        %s261 = scalar_lea.vmem [#allocation8], %s260
        %vm263 = vcmask 138240
        %264 = vst.msk [vmem:[#allocation2] sm:$0xff] %vm263, 0.0
        %265 = vst.msk [vmem:[#allocation2 + $0x18] sm:$0xff] %vm263, 0.0
        %vm266 = vcmask 277640
        %267 = vst.msk [vmem:[#allocation2 + $0x10] sm:$0xff] %vm266, 0.0
        %268 = vst.msk [vmem:[#allocation2 + $0x28] sm:$0xff] %vm266, 0.0
        %v269 = vld [vmem:[%s229] sm:$0xff]
        %v270 = vld [vmem:[%s229 + $0x8] sm:$0xff]
        %v271 = vld [vmem:[%s229 + $0x10] sm:$0xff]
        %v272 = vld [vmem:[%s229 + $0x18] sm:$0xff]
        %277 = vrot.lane.b32.xlu0 %v269, 17
        %v278 = vpop.permute.xlu0 %277
        %279 = vrot.lane.b32.xlu0 %v270, 17
        %v280 = vpop.permute.xlu0 %279
        %281 = vrot.lane.b32.xlu0 %v271, 17
        %v282 = vpop.permute.xlu0 %281
        %283 = vrot.lane.b32.xlu0 %v272, 17
        %v284 = vpop.permute.xlu0 %283
        %v285 = vsel %vm263, %v278, %v280
        %v286 = vsel %vm263, %v282, %v284
        %vm293 = vcmask 1047688
        %294 = vst.msk [vmem:[#allocation2] sm:$0xff] %vm293, %v278
        %295 = vst [vmem:[#allocation2 + $0x8] sm:$0xff] %v285
        %296 = vst.msk [vmem:[#allocation2 + $0x10] sm:$0xff] %vm263, %v280
        %297 = vst.msk [vmem:[#allocation2 + $0x18] sm:$0xff] %vm293, %v282
        %298 = vst [vmem:[#allocation2 + $0x20] sm:$0xff] %v286
        %299 = vst.msk [vmem:[#allocation2 + $0x28] sm:$0xff] %vm263, %v284
        %v300 = vlaneseq
        %v301 = vand.u32 %v300, 127
        %v302 = vadd.s32 %v301, 128
        %vm303 = vcmp.lt.s32.totalorder %v301, 0
        %v304 = vsub.s32 0, %v301
        %v305 = vsel %vm303, %v304, %v301
        %v306 = vshrl.u32 %v305, 4
        %v307 = vand.u32 %v305, 15
        %v308 = vsub.s32 0, %v307
        %v309 = vsel %vm303, %v308, %v307
        %vm310 = vcmp.lt.s32.totalorder %v302, 0
        %v311 = vsub.s32 0, %v302
        %v312 = vsel %vm310, %v311, %v302
        %v313 = vshrl.u32 %v312, 4
        %v314 = vand.u32 %v312, 15
        %v315 = vsub.s32 0, %v314
        %v316 = vsel %vm310, %v315, %v314
        %vm317 = vcmp.ne.s32.totalorder %v309, 0
        %vm318 = vcmp.ne.s32.totalorder %v316, 0
        %vm319 = vcmp.lt.s32.totalorder %v309, 0
        %vm320 = vcmp.lt.s32.totalorder %v316, 0
        %vm321 = vmand %vm319, %vm317
        %vm322 = vmand %vm320, %vm318
        %v323 = vadd.s32 %v309, 16
        %v324 = vadd.s32 %v316, 16
        %v325 = vsel %vm321, %v323, %v309
        %v326 = vsel %vm322, %v324, %v316
        %vm327 = vcmp.ge.s32.totalorder %v325, 1
        %vm328 = vcmp.ge.s32.totalorder %v326, 1
        %vm329 = vcmp.lt.s32.totalorder %v325, 15
        %vm330 = vcmp.lt.s32.totalorder %v326, 15
        %v331 = vld [vmem:[#allocation2] sm:$0xff]
        %v332 = vld [vmem:[#allocation2 + $0x8] sm:$0xff]
        %v333 = vld [vmem:[#allocation2 + $0x18] sm:$0xff]
        %v334 = vld [vmem:[#allocation2 + $0x20] sm:$0xff]
        %v335 = vsel %vm327, 1, 0
        %v336 = vsel %vm328, 1, 0
        %vm337 = vcmp.eq.s32.totalorder %v335, 1
        %vm338 = vcmp.eq.s32.totalorder %v336, 1
        %v339 = vsel %vm337, %v331, 0.0
        %v340 = vsel %vm338, %v332, 0.0
        %v341 = vsel %vm337, %v333, 0.0
        %v342 = vsel %vm338, %v334, 0.0
        %v343 = vld [vmem:[#allocation6] sm:$0xf]
        %v344 = vld [vmem:[#allocation6 + $0x4] sm:$0xf]
        %v345 = vpack.c.bf16 %v341, %v339
        %v346 = vpack.c.bf16 %v342, %v340
        %v347 = vld [vmem:[#allocation2 + $0x10] sm:$0xff]
        %v348 = vld [vmem:[#allocation2 + $0x28] sm:$0xff]
        %s349 = scalar_lea.vmem [#allocation6], 8
        %v350 = vld [vmem:[%s349] sm:$0xf]
        %v351 = vld [vmem:[%s349 + $0x4] sm:$0xf]
        %v352 = vpack.c.bf16 %v333, %v331
        %v353 = vpack.c.bf16 %v334, %v332
        %v354 = vpack.c.bf16 %v348, %v347
        %v357 = vunpack.c.l.b16 %v350
        %v358 = vunpack.c.l.b16 %v351
        %v359 = vpack.c.b16 %v358, %v357
        %363 = vrot.lane.b32.xlu0 %v352, 127
        %v364 = vpop.permute.xlu0 %363
        %365 = vrot.lane.b32.xlu0 %v353, 127
        %v366 = vpop.permute.xlu0 %365
        %367 = vrot.lane.b32.xlu0 %v354, 127
        %v368 = vpop.permute.xlu0 %367
        %vm369 = vcmask 1039360
        %v370 = vsel %vm369, %v364, %v366
        %v371 = vsel %vm369, %v366, %v368
        %vm374 = vcmask 130048
        %v376 = vsel %vm374, %v359, 0
        %378 = vmatpush.bf16.msra.mxu0 0
        %379 = vmatpush.bf16.msra.mxu0 0
        %380 = vmatpush.bf16.msra.mxu0 0
        %381 = vmatpush.bf16.msra.mxu0 0
        %382 = vmatpush.bf16.msra.mxu0 0
        %383 = vmatpush.bf16.msra.mxu0 0
        %384 = vmatpush.bf16.msra.mxu0 0
        %385 = vmatpush.bf16.msra.mxu0 %v370
        %386 = vmatmul.bf16.gmra.mxu0 %v376
        %v387 = vpop.f32.mrf.mxu0
        %v388 = vadd.f32 0.0, %v387
        %v389 = vpop.f32.mrf.mxu0
        %v390 = vadd.f32 0.0, %v389
        %391 = vdwg.mxu0
        %392 = vmatpush.bf16.msra.mxu0 0
        %393 = vmatpush.bf16.msra.mxu0 0
        %394 = vmatpush.bf16.msra.mxu0 0
        %395 = vmatpush.bf16.msra.mxu0 0
        %396 = vmatpush.bf16.msra.mxu0 0
        %397 = vmatpush.bf16.msra.mxu0 0
        %398 = vmatpush.bf16.msra.mxu0 0
        %399 = vmatpush.bf16.msra.mxu0 %v371
        %400 = vmatmul.bf16.gmra.mxu0 %v376
        %v401 = vpop.f32.mrf.mxu0
        %v402 = vadd.f32 0.0, %v401
        %v403 = vpop.f32.mrf.mxu0
        %v404 = vadd.f32 0.0, %v403
        %405 = vdwg.mxu0
        %v408 = vunpack.c.l.b16 %v343
        %v409 = vunpack.c.l.b16 %v344
        %v410 = vpack.c.b16 %v409, %v408
        %v412 = vsel %vm374, %v410, 0
        %414 = vmatpush.bf16.msra.mxu0 0
        %415 = vmatpush.bf16.msra.mxu0 0
        %416 = vmatpush.bf16.msra.mxu0 0
        %417 = vmatpush.bf16.msra.mxu0 0
        %418 = vmatpush.bf16.msra.mxu0 0
        %419 = vmatpush.bf16.msra.mxu0 0
        %420 = vmatpush.bf16.msra.mxu0 0
        %421 = vmatpush.bf16.msra.mxu0 %v345
        %422 = vmatmul.bf16.gmra.mxu0 %v412
        %v423 = vpop.f32.mrf.mxu0
        %v424 = vadd.f32 %v388, %v423
        %v425 = vpop.f32.mrf.mxu0
        %v426 = vadd.f32 %v390, %v425
        %427 = vdwg.mxu0
        %428 = vmatpush.bf16.msra.mxu0 0
        %429 = vmatpush.bf16.msra.mxu0 0
        %430 = vmatpush.bf16.msra.mxu0 0
        %431 = vmatpush.bf16.msra.mxu0 0
        %432 = vmatpush.bf16.msra.mxu0 0
        %433 = vmatpush.bf16.msra.mxu0 0
        %434 = vmatpush.bf16.msra.mxu0 0
        %435 = vmatpush.bf16.msra.mxu0 %v346
        %436 = vmatmul.bf16.gmra.mxu0 %v412
        %v437 = vpop.f32.mrf.mxu0
        %v438 = vadd.f32 %v402, %v437
        %v439 = vpop.f32.mrf.mxu0
        %v440 = vadd.f32 %v404, %v439
        %441 = vdwg.mxu0
        %v442 = vsel %vm329, 1, 0
        %v443 = vsel %vm330, 1, 0
        %vm444 = vcmp.eq.s32.totalorder %v442, 1
        %vm445 = vcmp.eq.s32.totalorder %v443, 1
        %452 = vrot.lane.b32.xlu0 %v331, 126
        %v453 = vpop.permute.xlu0 %452
        %454 = vrot.lane.b32.xlu0 %v332, 126
        %v455 = vpop.permute.xlu0 %454
        %456 = vrot.lane.b32.xlu0 %v347, 126
        %v457 = vpop.permute.xlu0 %456
        %458 = vrot.lane.b32.xlu0 %v333, 126
        %v459 = vpop.permute.xlu0 %458
        %460 = vrot.lane.b32.xlu0 %v334, 126
        %v461 = vpop.permute.xlu0 %460
        %462 = vrot.lane.b32.xlu0 %v348, 126
        %v463 = vpop.permute.xlu0 %462
        %vm464 = vcmask 1031168
        %v465 = vsel %vm464, %v453, %v455
        %v466 = vsel %vm464, %v455, %v457
        %v467 = vsel %vm464, %v459, %v461
        %v468 = vsel %vm464, %v461, %v463
        %v473 = vsel %vm444, %v465, 0.0
        %v474 = vsel %vm445, %v466, 0.0
        %v475 = vsel %vm444, %v467, 0.0
        %v476 = vsel %vm445, %v468, 0.0
        %s477 = scalar_lea.vmem [#allocation6], 16
        %v478 = vld [vmem:[%s477] sm:$0xf]
        %v479 = vld [vmem:[%s477 + $0x4] sm:$0xf]
        %v480 = vpack.c.bf16 %v475, %v473
        %v481 = vpack.c.bf16 %v476, %v474
        %v484 = vunpack.c.l.b16 %v478
        %v485 = vunpack.c.l.b16 %v479
        %v486 = vpack.c.b16 %v485, %v484
        %v488 = vsel %vm374, %v486, 0
        %490 = vmatpush.bf16.msra.mxu0 0
        %491 = vmatpush.bf16.msra.mxu0 0
        %492 = vmatpush.bf16.msra.mxu0 0
        %493 = vmatpush.bf16.msra.mxu0 0
        %494 = vmatpush.bf16.msra.mxu0 0
        %495 = vmatpush.bf16.msra.mxu0 0
        %496 = vmatpush.bf16.msra.mxu0 0
        %497 = vmatpush.bf16.msra.mxu0 %v480
        %498 = vmatmul.bf16.gmra.mxu0 %v488
        %v499 = vpop.f32.mrf.mxu0
        %v500 = vadd.f32 0.0, %v499
        %v501 = vpop.f32.mrf.mxu0
        %v502 = vadd.f32 0.0, %v501
        %503 = vdwg.mxu0
        %504 = vmatpush.bf16.msra.mxu0 0
        %505 = vmatpush.bf16.msra.mxu0 0
        %506 = vmatpush.bf16.msra.mxu0 0
        %507 = vmatpush.bf16.msra.mxu0 0
        %508 = vmatpush.bf16.msra.mxu0 0
        %509 = vmatpush.bf16.msra.mxu0 0
        %510 = vmatpush.bf16.msra.mxu0 0
        %511 = vmatpush.bf16.msra.mxu0 %v481
        %512 = vmatmul.bf16.gmra.mxu0 %v488
        %v513 = vpop.f32.mrf.mxu0
        %v514 = vadd.f32 0.0, %v513
        %v515 = vpop.f32.mrf.mxu0
        %v516 = vadd.f32 0.0, %v515
        %517 = vdwg.mxu0
        %v518 = vadd.f32 %v424, %v500
        %v519 = vadd.f32 %v438, %v514
        %v520 = vadd.f32 %v426, %v502
        %v521 = vadd.f32 %v440, %v516
        %522 = vrot.lane.b32.xlu0 %v331, 112
        %v523 = vpop.permute.xlu0 %522
        %524 = vrot.lane.b32.xlu0 %v332, 112
        %v525 = vpop.permute.xlu0 %524
        %526 = vrot.lane.b32.xlu0 %v347, 112
        %v527 = vpop.permute.xlu0 %526
        %528 = vrot.lane.b32.xlu0 %v333, 112
        %v529 = vpop.permute.xlu0 %528
        %530 = vrot.lane.b32.xlu0 %v334, 112
        %v531 = vpop.permute.xlu0 %530
        %532 = vrot.lane.b32.xlu0 %v348, 112
        %v533 = vpop.permute.xlu0 %532
        %vm534 = vcmask 916480
        %v535 = vsel %vm534, %v523, %v525
        %v536 = vsel %vm534, %v525, %v527
        %v537 = vsel %vm534, %v529, %v531
        %v538 = vsel %vm534, %v531, %v533
        %v543 = vsel %vm337, %v535, 0.0
        %v544 = vsel %vm338, %v536, 0.0
        %v545 = vsel %vm337, %v537, 0.0
        %v546 = vsel %vm338, %v538, 0.0
        %s547 = scalar_lea.vmem [#allocation6], 24
        %v548 = vld [vmem:[%s547] sm:$0xf]
        %v549 = vld [vmem:[%s547 + $0x4] sm:$0xf]
        %v550 = vpack.c.bf16 %v545, %v543
        %v551 = vpack.c.bf16 %v546, %v544
        %v554 = vunpack.c.l.b16 %v548
        %v555 = vunpack.c.l.b16 %v549
        %v556 = vpack.c.b16 %v555, %v554
        %v558 = vsel %vm374, %v556, 0
        %560 = vmatpush.bf16.msra.mxu0 0
        %561 = vmatpush.bf16.msra.mxu0 0
        %562 = vmatpush.bf16.msra.mxu0 0
        %563 = vmatpush.bf16.msra.mxu0 0
        %564 = vmatpush.bf16.msra.mxu0 0
        %565 = vmatpush.bf16.msra.mxu0 0
        %566 = vmatpush.bf16.msra.mxu0 0
        %567 = vmatpush.bf16.msra.mxu0 %v550
        %568 = vmatmul.bf16.gmra.mxu0 %v558
        %v569 = vpop.f32.mrf.mxu0
        %v570 = vadd.f32 0.0, %v569
        %v571 = vpop.f32.mrf.mxu0
        %v572 = vadd.f32 0.0, %v571
        %573 = vdwg.mxu0
        %574 = vmatpush.bf16.msra.mxu0 0
        %575 = vmatpush.bf16.msra.mxu0 0
        %576 = vmatpush.bf16.msra.mxu0 0
        %577 = vmatpush.bf16.msra.mxu0 0
        %578 = vmatpush.bf16.msra.mxu0 0
        %579 = vmatpush.bf16.msra.mxu0 0
        %580 = vmatpush.bf16.msra.mxu0 0
        %581 = vmatpush.bf16.msra.mxu0 %v551
        %582 = vmatmul.bf16.gmra.mxu0 %v558
        %v583 = vpop.f32.mrf.mxu0
        %v584 = vadd.f32 0.0, %v583
        %v585 = vpop.f32.mrf.mxu0
        %v586 = vadd.f32 0.0, %v585
        %587 = vdwg.mxu0
        %v588 = vadd.f32 %v518, %v570
        %v589 = vadd.f32 %v519, %v584
        %v590 = vadd.f32 %v520, %v572
        %v591 = vadd.f32 %v521, %v586
        %s592 = scalar_lea.vmem [#allocation6], 32
        %v593 = vld [vmem:[%s592] sm:$0xf]
        %v594 = vld [vmem:[%s592 + $0x4] sm:$0xf]
        %v597 = vunpack.c.l.b16 %v593
        %v598 = vunpack.c.l.b16 %v594
        %v599 = vpack.c.b16 %v598, %v597
        %600 = vrot.lane.b32.xlu0 %v352, 111
        %v601 = vpop.permute.xlu0 %600
        %602 = vrot.lane.b32.xlu0 %v353, 111
        %v603 = vpop.permute.xlu0 %602
        %604 = vrot.lane.b32.xlu0 %v354, 111
        %v605 = vpop.permute.xlu0 %604
        %vm606 = vcmask 908288
        %v607 = vsel %vm606, %v601, %v603
        %v608 = vsel %vm606, %v603, %v605
        %v612 = vsel %vm374, %v599, 0
        %614 = vmatpush.bf16.msra.mxu0 0
        %615 = vmatpush.bf16.msra.mxu0 0
        %616 = vmatpush.bf16.msra.mxu0 0
        %617 = vmatpush.bf16.msra.mxu0 0
        %618 = vmatpush.bf16.msra.mxu0 0
        %619 = vmatpush.bf16.msra.mxu0 0
        %620 = vmatpush.bf16.msra.mxu0 0
        %621 = vmatpush.bf16.msra.mxu0 %v607
        %622 = vmatmul.bf16.gmra.mxu0 %v612
        %v623 = vpop.f32.mrf.mxu0
        %v624 = vadd.f32 0.0, %v623
        %v625 = vpop.f32.mrf.mxu0
        %v626 = vadd.f32 0.0, %v625
        %627 = vdwg.mxu0
        %628 = vmatpush.bf16.msra.mxu0 0
        %629 = vmatpush.bf16.msra.mxu0 0
        %630 = vmatpush.bf16.msra.mxu0 0
        %631 = vmatpush.bf16.msra.mxu0 0
        %632 = vmatpush.bf16.msra.mxu0 0
        %633 = vmatpush.bf16.msra.mxu0 0
        %634 = vmatpush.bf16.msra.mxu0 0
        %635 = vmatpush.bf16.msra.mxu0 %v608
        %636 = vmatmul.bf16.gmra.mxu0 %v612
        %v637 = vpop.f32.mrf.mxu0
        %v638 = vadd.f32 0.0, %v637
        %v639 = vpop.f32.mrf.mxu0
        %v640 = vadd.f32 0.0, %v639
        %641 = vdwg.mxu0
        %v642 = vadd.f32 %v588, %v624
        %v643 = vadd.f32 %v589, %v638
        %v644 = vadd.f32 %v590, %v626
        %v645 = vadd.f32 %v591, %v640
        %646 = vrot.lane.b32.xlu0 %v331, 110
        %v647 = vpop.permute.xlu0 %646
        %648 = vrot.lane.b32.xlu0 %v332, 110
        %v649 = vpop.permute.xlu0 %648
        %650 = vrot.lane.b32.xlu0 %v347, 110
        %v651 = vpop.permute.xlu0 %650
        %652 = vrot.lane.b32.xlu0 %v333, 110
        %v653 = vpop.permute.xlu0 %652
        %654 = vrot.lane.b32.xlu0 %v334, 110
        %v655 = vpop.permute.xlu0 %654
        %656 = vrot.lane.b32.xlu0 %v348, 110
        %v657 = vpop.permute.xlu0 %656
        %vm658 = vcmask 900096
        %v659 = vsel %vm658, %v647, %v649
        %v660 = vsel %vm658, %v649, %v651
        %v661 = vsel %vm658, %v653, %v655
        %v662 = vsel %vm658, %v655, %v657
        %v667 = vsel %vm444, %v659, 0.0
        %v668 = vsel %vm445, %v660, 0.0
        %v669 = vsel %vm444, %v661, 0.0
        %v670 = vsel %vm445, %v662, 0.0
        %s671 = scalar_lea.vmem [#allocation6], 40
        %v672 = vld [vmem:[%s671] sm:$0xf]
        %v673 = vld [vmem:[%s671 + $0x4] sm:$0xf]
        %v674 = vpack.c.bf16 %v669, %v667
        %v675 = vpack.c.bf16 %v670, %v668
        %v678 = vunpack.c.l.b16 %v672
        %v679 = vunpack.c.l.b16 %v673
        %v680 = vpack.c.b16 %v679, %v678
        %v682 = vsel %vm374, %v680, 0
        %684 = vmatpush.bf16.msra.mxu0 0
        %685 = vmatpush.bf16.msra.mxu0 0
        %686 = vmatpush.bf16.msra.mxu0 0
        %687 = vmatpush.bf16.msra.mxu0 0
        %688 = vmatpush.bf16.msra.mxu0 0
        %689 = vmatpush.bf16.msra.mxu0 0
        %690 = vmatpush.bf16.msra.mxu0 0
        %691 = vmatpush.bf16.msra.mxu0 %v674
        %692 = vmatmul.bf16.gmra.mxu0 %v682
        %v693 = vpop.f32.mrf.mxu0
        %v694 = vadd.f32 0.0, %v693
        %v695 = vpop.f32.mrf.mxu0
        %v696 = vadd.f32 0.0, %v695
        %697 = vdwg.mxu0
        %698 = vmatpush.bf16.msra.mxu0 0
        %699 = vmatpush.bf16.msra.mxu0 0
        %700 = vmatpush.bf16.msra.mxu0 0
        %701 = vmatpush.bf16.msra.mxu0 0
        %702 = vmatpush.bf16.msra.mxu0 0
        %703 = vmatpush.bf16.msra.mxu0 0
        %704 = vmatpush.bf16.msra.mxu0 0
        %705 = vmatpush.bf16.msra.mxu0 %v675
        %706 = vmatmul.bf16.gmra.mxu0 %v682
        %v707 = vpop.f32.mrf.mxu0
        %v708 = vadd.f32 0.0, %v707
        %v709 = vpop.f32.mrf.mxu0
        %v710 = vadd.f32 0.0, %v709
        %711 = vdwg.mxu0
        %v712 = vadd.f32 %v642, %v694
        %v713 = vadd.f32 %v643, %v708
        %v714 = vadd.f32 %v644, %v696
        %v715 = vadd.f32 %v645, %v710
        %716 = vrot.lane.b32.xlu0 %v331, 96
        %v717 = vpop.permute.xlu0 %716
        %718 = vrot.lane.b32.xlu0 %v332, 96
        %v719 = vpop.permute.xlu0 %718
        %720 = vrot.lane.b32.xlu0 %v347, 96
        %v721 = vpop.permute.xlu0 %720
        %722 = vrot.lane.b32.xlu0 %v333, 96
        %v723 = vpop.permute.xlu0 %722
        %724 = vrot.lane.b32.xlu0 %v334, 96
        %v725 = vpop.permute.xlu0 %724
        %726 = vrot.lane.b32.xlu0 %v348, 96
        %v727 = vpop.permute.xlu0 %726
        %vm728 = vcmask 785408
        %v729 = vsel %vm728, %v717, %v719
        %v730 = vsel %vm728, %v719, %v721
        %v731 = vsel %vm728, %v723, %v725
        %v732 = vsel %vm728, %v725, %v727
        %v737 = vsel %vm337, %v729, 0.0
        %v738 = vsel %vm338, %v730, 0.0
        %v739 = vsel %vm337, %v731, 0.0
        %v740 = vsel %vm338, %v732, 0.0
        %s741 = scalar_lea.vmem [#allocation6], 48
        %v742 = vld [vmem:[%s741] sm:$0xf]
        %v743 = vld [vmem:[%s741 + $0x4] sm:$0xf]
        %v744 = vpack.c.bf16 %v739, %v737
        %v745 = vpack.c.bf16 %v740, %v738
        %v748 = vunpack.c.l.b16 %v742
        %v749 = vunpack.c.l.b16 %v743
        %v750 = vpack.c.b16 %v749, %v748
        %v752 = vsel %vm374, %v750, 0
        %754 = vmatpush.bf16.msra.mxu0 0
        %755 = vmatpush.bf16.msra.mxu0 0
        %756 = vmatpush.bf16.msra.mxu0 0
        %757 = vmatpush.bf16.msra.mxu0 0
        %758 = vmatpush.bf16.msra.mxu0 0
        %759 = vmatpush.bf16.msra.mxu0 0
        %760 = vmatpush.bf16.msra.mxu0 0
        %761 = vmatpush.bf16.msra.mxu0 %v744
        %762 = vmatmul.bf16.gmra.mxu0 %v752
        %v763 = vpop.f32.mrf.mxu0
        %v764 = vadd.f32 0.0, %v763
        %v765 = vpop.f32.mrf.mxu0
        %v766 = vadd.f32 0.0, %v765
        %767 = vdwg.mxu0
        %768 = vmatpush.bf16.msra.mxu0 0
        %769 = vmatpush.bf16.msra.mxu0 0
        %770 = vmatpush.bf16.msra.mxu0 0
        %771 = vmatpush.bf16.msra.mxu0 0
        %772 = vmatpush.bf16.msra.mxu0 0
        %773 = vmatpush.bf16.msra.mxu0 0
        %774 = vmatpush.bf16.msra.mxu0 0
        %775 = vmatpush.bf16.msra.mxu0 %v745
        %776 = vmatmul.bf16.gmra.mxu0 %v752
        %v777 = vpop.f32.mrf.mxu0
        %v778 = vadd.f32 0.0, %v777
        %v779 = vpop.f32.mrf.mxu0
        %v780 = vadd.f32 0.0, %v779
        %781 = vdwg.mxu0
        %v782 = vadd.f32 %v712, %v764
        %v783 = vadd.f32 %v713, %v778
        %v784 = vadd.f32 %v714, %v766
        %v785 = vadd.f32 %v715, %v780
        %s786 = scalar_lea.vmem [#allocation6], 56
        %v787 = vld [vmem:[%s786] sm:$0xf]
        %v788 = vld [vmem:[%s786 + $0x4] sm:$0xf]
        %v791 = vunpack.c.l.b16 %v787
        %v792 = vunpack.c.l.b16 %v788
        %v793 = vpack.c.b16 %v792, %v791
        %794 = vrot.lane.b32.xlu0 %v352, 95
        %v795 = vpop.permute.xlu0 %794
        %796 = vrot.lane.b32.xlu0 %v353, 95
        %v797 = vpop.permute.xlu0 %796
        %798 = vrot.lane.b32.xlu0 %v354, 95
        %v799 = vpop.permute.xlu0 %798
        %vm800 = vcmask 777216
        %v801 = vsel %vm800, %v795, %v797
        %v802 = vsel %vm800, %v797, %v799
        %v806 = vsel %vm374, %v793, 0
        %808 = vmatpush.bf16.msra.mxu0 0
        %809 = vmatpush.bf16.msra.mxu0 0
        %810 = vmatpush.bf16.msra.mxu0 0
        %811 = vmatpush.bf16.msra.mxu0 0
        %812 = vmatpush.bf16.msra.mxu0 0
        %813 = vmatpush.bf16.msra.mxu0 0
        %814 = vmatpush.bf16.msra.mxu0 0
        %815 = vmatpush.bf16.msra.mxu0 %v801
        %816 = vmatmul.bf16.gmra.mxu0 %v806
        %v817 = vpop.f32.mrf.mxu0
        %v818 = vadd.f32 0.0, %v817
        %v819 = vpop.f32.mrf.mxu0
        %v820 = vadd.f32 0.0, %v819
        %821 = vdwg.mxu0
        %822 = vmatpush.bf16.msra.mxu0 0
        %823 = vmatpush.bf16.msra.mxu0 0
        %824 = vmatpush.bf16.msra.mxu0 0
        %825 = vmatpush.bf16.msra.mxu0 0
        %826 = vmatpush.bf16.msra.mxu0 0
        %827 = vmatpush.bf16.msra.mxu0 0
        %828 = vmatpush.bf16.msra.mxu0 0
        %829 = vmatpush.bf16.msra.mxu0 %v802
        %830 = vmatmul.bf16.gmra.mxu0 %v806
        %v831 = vpop.f32.mrf.mxu0
        %v832 = vadd.f32 0.0, %v831
        %v833 = vpop.f32.mrf.mxu0
        %v834 = vadd.f32 0.0, %v833
        %835 = vdwg.mxu0
        %v836 = vadd.f32 %v782, %v818
        %v837 = vadd.f32 %v783, %v832
        %v838 = vadd.f32 %v784, %v820
        %v839 = vadd.f32 %v785, %v834
        %840 = vrot.lane.b32.xlu0 %v331, 94
        %v841 = vpop.permute.xlu0 %840
        %842 = vrot.lane.b32.xlu0 %v332, 94
        %v843 = vpop.permute.xlu0 %842
        %844 = vrot.lane.b32.xlu0 %v347, 94
        %v845 = vpop.permute.xlu0 %844
        %846 = vrot.lane.b32.xlu0 %v333, 94
        %v847 = vpop.permute.xlu0 %846
        %848 = vrot.lane.b32.xlu0 %v334, 94
        %v849 = vpop.permute.xlu0 %848
        %850 = vrot.lane.b32.xlu0 %v348, 94
        %v851 = vpop.permute.xlu0 %850
        %vm852 = vcmask 769024
        %v853 = vsel %vm852, %v841, %v843
        %v854 = vsel %vm852, %v843, %v845
        %v855 = vsel %vm852, %v847, %v849
        %v856 = vsel %vm852, %v849, %v851
        %v861 = vsel %vm444, %v853, 0.0
        %v862 = vsel %vm445, %v854, 0.0
        %v863 = vsel %vm444, %v855, 0.0
        %v864 = vsel %vm445, %v856, 0.0
        %s865 = scalar_lea.vmem [#allocation6], 64
        %v866 = vld [vmem:[%s865] sm:$0xf]
        %v867 = vld [vmem:[%s865 + $0x4] sm:$0xf]
        %v868 = vpack.c.bf16 %v863, %v861
        %v869 = vpack.c.bf16 %v864, %v862
        %v872 = vunpack.c.l.b16 %v866
        %v873 = vunpack.c.l.b16 %v867
        %v874 = vpack.c.b16 %v873, %v872
        %v876 = vsel %vm374, %v874, 0
        %878 = vmatpush.bf16.msra.mxu0 0
        %879 = vmatpush.bf16.msra.mxu0 0
        %880 = vmatpush.bf16.msra.mxu0 0
        %881 = vmatpush.bf16.msra.mxu0 0
        %882 = vmatpush.bf16.msra.mxu0 0
        %883 = vmatpush.bf16.msra.mxu0 0
        %884 = vmatpush.bf16.msra.mxu0 0
        %885 = vmatpush.bf16.msra.mxu0 %v868
        %886 = vmatmul.bf16.gmra.mxu0 %v876
        %v887 = vpop.f32.mrf.mxu0
        %v888 = vadd.f32 0.0, %v887
        %v889 = vpop.f32.mrf.mxu0
        %v890 = vadd.f32 0.0, %v889
        %891 = vdwg.mxu0
        %892 = vmatpush.bf16.msra.mxu0 0
        %893 = vmatpush.bf16.msra.mxu0 0
        %894 = vmatpush.bf16.msra.mxu0 0
        %895 = vmatpush.bf16.msra.mxu0 0
        %896 = vmatpush.bf16.msra.mxu0 0
        %897 = vmatpush.bf16.msra.mxu0 0
        %898 = vmatpush.bf16.msra.mxu0 0
        %899 = vmatpush.bf16.msra.mxu0 %v869
        %900 = vmatmul.bf16.gmra.mxu0 %v876
        %v901 = vpop.f32.mrf.mxu0
        %v902 = vadd.f32 0.0, %v901
        %v903 = vpop.f32.mrf.mxu0
        %v904 = vadd.f32 0.0, %v903
        %905 = vdwg.mxu0
        %v906 = vadd.f32 %v836, %v888
        %v907 = vadd.f32 %v837, %v902
        %v908 = vadd.f32 %v838, %v890
        %v909 = vadd.f32 %v839, %v904
        %v910 = vld [vmem:[%s2] sm:$0xff]
        %v911 = vld [vmem:[%s2 + $0x8] sm:$0xff]
        %913 = vset.pattern.permute.xlu0 0
        %914 = vperm.xlu0 %913, %v910
        %v915 = vpop.permute.xlu0 %914
        %918 = vset.pattern.permute.xlu0 0
        %919 = vperm.xlu0 %918, %v911
        %v920 = vpop.permute.xlu0 %919
        %v922 = vadd.f32 %v906, %v915
        %v923 = vadd.f32 %v907, %v915
        %v924 = vadd.f32 %v908, %v920
        %v925 = vadd.f32 %v909, %v920
        %v926 = vmax.f32 %v922, 0.0
        %v927 = vmax.f32 %v923, 0.0
        %v928 = vmax.f32 %v924, 0.0
        %v929 = vmax.f32 %v925, 0.0
        %v930 = vld [vmem:[%s3] sm:$0xf]
        %v931 = vld [vmem:[%s3 + $0x4] sm:$0xf]
        %v932 = vpack.c.bf16 %v928, %v926
        %v933 = vpack.c.bf16 %v929, %v927
        %v934 = vld [vmem:[%s4] sm:$0xff]
        %v935 = vld [vmem:[%s4 + $0x8] sm:$0xff]
        %937 = vset.pattern.permute.xlu0 0
        %938 = vperm.xlu0 %937, %v934
        %v939 = vpop.permute.xlu0 %938
        %942 = vset.pattern.permute.xlu0 0
        %943 = vperm.xlu0 %942, %v935
        %v944 = vpop.permute.xlu0 %943
        %v948 = vunpack.c.l.b16 %v930
        %v949 = vunpack.c.l.b16 %v931
        %v950 = vpack.c.b16 %v949, %v948
        %v952 = vsel %vm374, %v950, 0
        %954 = vmatpush.bf16.msra.mxu0 0
        %955 = vmatpush.bf16.msra.mxu0 0
        %956 = vmatpush.bf16.msra.mxu0 0
        %957 = vmatpush.bf16.msra.mxu0 0
        %958 = vmatpush.bf16.msra.mxu0 0
        %959 = vmatpush.bf16.msra.mxu0 0
        %960 = vmatpush.bf16.msra.mxu0 0
        %961 = vmatpush.bf16.msra.mxu0 %v932
        %962 = vmatmul.bf16.gmra.mxu0 %v952
        %v963 = vpop.f32.mrf.mxu0
        %v964 = vadd.f32 %v939, %v963
        %v965 = vpop.f32.mrf.mxu0
        %v966 = vadd.f32 %v944, %v965
        %967 = vdwg.mxu0
        %968 = vmatpush.bf16.msra.mxu0 0
        %969 = vmatpush.bf16.msra.mxu0 0
        %970 = vmatpush.bf16.msra.mxu0 0
        %971 = vmatpush.bf16.msra.mxu0 0
        %972 = vmatpush.bf16.msra.mxu0 0
        %973 = vmatpush.bf16.msra.mxu0 0
        %974 = vmatpush.bf16.msra.mxu0 0
        %975 = vmatpush.bf16.msra.mxu0 %v933
        %976 = vmatmul.bf16.gmra.mxu0 %v952
        %v977 = vpop.f32.mrf.mxu0
        %v978 = vadd.f32 %v939, %v977
        %v979 = vpop.f32.mrf.mxu0
        %v980 = vadd.f32 %v944, %v979
        %981 = vdwg.mxu0
        %982 = vst [vmem:[%s261] sm:$0xff] %v964
        %983 = vst [vmem:[%s261 + $0x8] sm:$0xff] %v978
        %984 = vst [vmem:[%s261 + $0x10] sm:$0xff] %v966
        %985 = vst [vmem:[%s261 + $0x18] sm:$0xff] %v980
        %s986 = sand.u32 %s141, 1
        %s987 = scalar_lea.sflag [#allocation5], %s986
        %s988 = sand.u32 %s141, 1
        %s989 = smul.addr %s988, 32
        %s990 = scalar_lea.vmem [#allocation8], %s989
        // Predicated region
        $region49: #{tpu_custom_call.1} parent=39 // pred_check
          %p991 = pneg %p151
        $region50: #{tpu_custom_call.1} parent=39 // pred_check_branch
          %993 = sbr.rel (%p991) target = $region52
        $region51: #{tpu_custom_call.1} parent=39 // pred_region
          %995 = vsyncadd %s987, 0
          %s996 = smul.addr %s23, 4
          %s997 = smul.addr %s996, 8
          %s998 = scalar_lea.hbm %s5, %s997
          %s999 = sshll.u32 %s990, 4
          %s1000 = int_to_ptr.vmem [resolvable:$true] %s999
          %s1001 = sshll.u32 %s998, 4
          %s1002 = int_to_ptr.hbm [resolvable:$true] %s1001
          %1007 = dma.vmem_to_hbm [thread:$0]  %s1000, 512, %s1002, %s987, 256, 256, 16
        $region52: #{tpu_custom_call.1} parent=39 // pred_fallthru
          _
      $region40: #{tpu_custom_call.1} parent=5 // pred_fallthru
        _
      %p1008 = scmp.le.s32.totalorder 2, %s18
      // Predicated region
      $region53: #{tpu_custom_call.1} parent=5 // pred_check
        %p1009 = pneg %p1008
      $region54: #{tpu_custom_call.1} parent=5 // pred_check_branch
        %1011 = sbr.rel (%p1009) target = $region56
      $region55: #{tpu_custom_call.1} parent=5 // pred_region
        %s1012 = ssub.s32 %s18, 2
        // Predicated region
        $region57: #{tpu_custom_call.1} parent=55 // pred_check
          %p1013 = pneg %p157
        $region58: #{tpu_custom_call.1} parent=55 // pred_check_branch
          %1015 = sbr.rel (%p1013) target = $region60
        $region59: #{tpu_custom_call.1} parent=55 // pred_region
          %s1016 = sand.u32 %s142, 1
          %s1017 = scalar_lea.sflag [#allocation5], %s1016
          %s1018 = sand.u32 %s142, 1
          %s1019 = smul.addr %s1018, 32
          %s1020 = scalar_lea.vmem [#allocation8], %s1019
          %1022 = dma.done %s1017, 512
        $region60: #{tpu_custom_call.1} parent=55 // pred_fallthru
          _
      $region56: #{tpu_custom_call.1} parent=5 // pred_fallthru
        _
    $region6: #{tpu_custom_call.1} parent=1 // loop_footer
      %s22 = sadd.s32 1, %s18
    $region7: #{tpu_custom_call.1} parent=1 // loop_footer_branch
      %17 = sbr.rel target = $region3
    $region8: #{tpu_custom_call.1} parent=1 // loop_exit
      _
    %1023 = vsyncpa [#allocation4], 1
    %s1024 = scalar_lea.sflag [#allocation4], 1
    %1025 = vsyncpa %s1024, 1
    %1026 = vsyncpa [#allocation7], 1
    %1027 = vsyncpa [#allocation5], 1
    %s1028 = scalar_lea.sflag [#allocation5], 1
    %1029 = vsyncpa %s1028, 1

</llo_original>
